<compile_context>
chip_gen: v7x
topology: tpu7x:2x2x1
jax: 0.10.0
libtpu: 0.0.40
codegen_flags: <defaults>
</compile_context>

<pallas_src>
import numpy as np
import jax
import jax.numpy as jnp
from jax.experimental import pallas as pl
from jax.experimental.pallas import tpu as pltpu

EPS = 1e-5  # nn.BatchNorm2d default


def _residual_block_kernel(x_ref, w1_ref, w2_ref, g1_ref, b1_ref, g2_ref, b2_ref, o_ref):
    P, C = x_ref.shape            # P = H*W*N pixels (spatial-major rows), C channels (unpadded)
    S = w1_ref.shape[0]           # number of output spatial positions (= H*W <= 4)
    N = P // S                    # batch rows per spatial position
    inv_p = 1.0 / P

    x = x_ref[...]                # (P, C) f32

    def conv(a, w_ref):
        # Spatial-major rows: block s (rows s*N:(s+1)*N) uses exactly one kernel tap,
        # pre-gathered into w_ref[s]  ->  one small MXU dot per spatial position.
        # Default matmul precision passes 5e-4 vs. the HIGHEST-precision reference at C=32;
        # switch to precision=HIGHEST if C or input magnitudes grow.
        return jnp.concatenate(
            [jnp.dot(a[s * N:(s + 1) * N, :], w_ref[s],
                     preferred_element_type=jnp.float32)
             for s in range(S)],
            axis=0)

    def bn(a, g_ref, b_ref):
        # Training-mode (biased) batch stats, single pass, folded to one FMA per element.
        mu = jnp.sum(a, axis=0, keepdims=True) * inv_p
        ex2 = jnp.sum(a * a, axis=0, keepdims=True) * inv_p
        scale = g_ref[...] * jax.lax.rsqrt(ex2 - mu * mu + EPS)   # EUP rsqrt
        shift = b_ref[...] - mu * scale
        return a * scale + shift

    y = jnp.maximum(bn(conv(x, w1_ref), g1_ref, b1_ref), 0.0)
    z = bn(conv(y, w2_ref), g2_ref, b2_ref)
    o_ref[...] = jnp.maximum(z + x, 0.0)   # residual add (downsample is None) + ReLU


def residual_block_pallas(x_pix, w1_s, w2_s, g1, b1, g2, b2):
    """x_pix: (P, C) f32 spatial-major rows; w*_s: (S, C, C); BN params: (1, C)."""
    P, C = x_pix.shape
    nbytes = 4 * (x_pix.size + w1_s.size + w2_s.size + 4 * C + P * C)
    vmem = pl.BlockSpec(memory_space=pltpu.MemorySpace.VMEM)
    return pl.pallas_call(
        _residual_block_kernel,
        out_shape=jax.ShapeDtypeStruct((P, C), jnp.float32),
        in_specs=[vmem] * 7,
        out_specs=vmem,
        cost_estimate=pl.CostEstimate(
            flops=4 * P * C * C + 20 * P * C,   # two convs + BN/ReLU/residual elementwise
            transcendentals=2 * C,              # one rsqrt per channel, two BNs
            bytes_accessed=nbytes),
    )(x_pix, w1_s, w2_s, g1, b1, g2, b2)


def pack_residual_block_params(w1, w2, g1, b1, g2, b2, H, W):
    """One-time packing (run when parameters change, NOT per forward call).

    For each output spatial position s = (oh, ow), the 2x2/stride-2/pad-1 conv reads the
    SAME input pixel through its single live tap (kh, kw) = (1 - oh, 1 - ow); gather that
    tap into a (C_in, C_out) matrix so the kernel does one small dot per spatial position.
    """
    C_out, C_in = w1.shape[:2]
    stride, pad, ks = 2, 1, 2
    Ho = (H + 2 * pad - ks) // stride + 1
    Wo = (W + 2 * pad - ks) // stride + 1
    assert (Ho, Wo) == (H, W) and H in (1, 2) and W in (1, 2), \
        "residual add (downsample=None) requires the spatial fixed point H, W in {1, 2}"
    assert C_out == C_in and w2.shape[:2] == (C_in, C_in), \
        "residual add (downsample=None) requires in_channels == out_channels"

    taps = [(1 - oh, 1 - ow) for oh in range(H) for ow in range(W)]

    def pack_w(w):   # OIHW (C, C, 2, 2) -> (S, C_in, C_out)
        return jnp.stack(
            [jnp.transpose(w[:, :, kh, kw]).astype(jnp.float32) for kh, kw in taps],
            axis=0)

    def pack_bn(v):
        return v.astype(jnp.float32).reshape(1, C_in)

    return (pack_w(w1), pack_w(w2),
            pack_bn(g1), pack_bn(b1), pack_bn(g2), pack_bn(b2))


def nchw_to_pix(x_nchw):
    """(N, C, H, W) -> (H*W*N, C) spatial-major rows (amortize once per network)."""
    N, C, H, W = x_nchw.shape
    return jnp.transpose(x_nchw, (2, 3, 0, 1)).reshape(H * W * N, C).astype(jnp.float32)


def pix_to_nchw(x_pix, N, C, H, W):
    """(H*W*N, C) spatial-major -> (N, C, H, W)."""
    return jnp.transpose(x_pix.reshape(H, W, N, C), (2, 3, 0, 1))


def residual_block_ref(x, w1, w2, g1, b1, g2, b2):
    """Pure-JAX reference matching the PyTorch forward (training-mode BN)."""
    def conv(a, w):
        return jax.lax.conv_general_dilated(
            a, w, (2, 2), ((1, 1), (1, 1)),
            dimension_numbers=("NCHW", "OIHW", "NCHW"),
            precision=jax.lax.Precision.HIGHEST)

    def bn(a, g, b):
        mu = jnp.mean(a, axis=(0, 2, 3), keepdims=True)
        var = jnp.mean((a - mu) ** 2, axis=(0, 2, 3), keepdims=True)
        return ((a - mu) * jax.lax.rsqrt(var + EPS) * g.reshape(1, -1, 1, 1)
                + b.reshape(1, -1, 1, 1))

    out = jnp.maximum(bn(conv(x, w1), g1, b1), 0.0)
    out = bn(conv(out, w2), g2, b2)
    return jnp.maximum(out + x, 0.0)


if __name__ == "__main__":
    # Spatial size is pinned to 2 by the module itself (k=2/s=2/p=1 + residual add with
    # downsample=None).  Channels deliberately stay at 32 (unpadded): at these shapes the
    # call is DMA/launch-bound and HBM bytes are the only lever.
    N, C, H, W = 8, 32, 2, 2

    key = jax.random.PRNGKey(0)
    kx, kw1, kw2, kg1, kb1, kg2, kb2 = jax.random.split(key, 7)
    x = jax.random.normal(kx, (N, C, H, W), dtype=jnp.float32)
    w1 = jax.random.normal(kw1, (C, C, 2, 2), dtype=jnp.float32) * 0.1
    w2 = jax.random.normal(kw2, (C, C, 2, 2), dtype=jnp.float32) * 0.1
    g1 = 1.0 + 0.1 * jax.random.normal(kg1, (C,), dtype=jnp.float32)
    b1 = 0.1 * jax.random.normal(kb1, (C,), dtype=jnp.float32)
    g2 = 1.0 + 0.1 * jax.random.normal(kg2, (C,), dtype=jnp.float32)
    b2 = 0.1 * jax.random.normal(kb2, (C,), dtype=jnp.float32)

    # One-time parameter packing + jit of the hot path; NCHW relayout stays outside the
    # jitted forward so chained blocks can stay on the (P, C) layout.
    params = pack_residual_block_params(w1, w2, g1, b1, g2, b2, H, W)
    fwd = jax.jit(residual_block_pallas)

    x_pix = nchw_to_pix(x)
    out_pix = jax.block_until_ready(fwd(x_pix, *params))
    out = pix_to_nchw(out_pix, N, C, H, W)

    ref = jax.block_until_ready(residual_block_ref(x, w1, w2, g1, b1, g2, b2))
    np.testing.assert_allclose(np.asarray(out), np.asarray(ref), atol=5e-4, rtol=5e-4)

    print("KERNEL_OK")
</pallas_src>

<mosaic_0001>
module attributes {stable_mosaic.version = 11 : i64} {
  func.func @_residual_block_kernel(%arg0: memref<32x32xf32, #tpu.memory_space<vmem>>, %arg1: memref<4x32x32xf32, #tpu.memory_space<vmem>>, %arg2: memref<4x32x32xf32, #tpu.memory_space<vmem>>, %arg3: memref<1x32xf32, #tpu.memory_space<vmem>>, %arg4: memref<1x32xf32, #tpu.memory_space<vmem>>, %arg5: memref<1x32xf32, #tpu.memory_space<vmem>>, %arg6: memref<1x32xf32, #tpu.memory_space<vmem>>, %arg7: memref<32x32xf32, #tpu.memory_space<vmem>>) attributes {dimension_semantics = [], scalar_prefetch = 0 : i64, scratch_operands = 0 : i64, tpu.core_type = #tpu.core_type<tc>} {
    %c0 = arith.constant 0 : index
    %c0_0 = arith.constant 0 : index
    %0 = vector.load %arg0[%c0, %c0_0] : memref<32x32xf32, #tpu.memory_space<vmem>>, vector<32x32xf32>
    %1 = vector.extract_strided_slice %0 {offsets = [0, 0], sizes = [8, 32], strides = [1, 1]} : vector<32x32xf32> to vector<8x32xf32>
    %c0_1 = arith.constant 0 : index
    %c0_2 = arith.constant 0 : index
    %c0_3 = arith.constant 0 : index
    %2 = vector.load %arg1[%c0_1, %c0_2, %c0_3] : memref<4x32x32xf32, #tpu.memory_space<vmem>>, vector<1x32x32xf32>
    %3 = vector.shape_cast %2 : vector<1x32x32xf32> to vector<32x32xf32>
    %cst = arith.constant dense<0.000000e+00> : vector<8x32xf32>
    %4 = tpu.matmul %1, %3, %cst {dimension_numbers = #tpu.dot_dimension_numbers<[1], [0], [0], [1], [0, 0, 1, 1], [], []>} : vector<8x32xf32>, vector<32x32xf32>, vector<8x32xf32> -> vector<8x32xf32>
    %5 = vector.extract_strided_slice %0 {offsets = [8, 0], sizes = [8, 32], strides = [1, 1]} : vector<32x32xf32> to vector<8x32xf32>
    %c1 = arith.constant 1 : index
    %c0_4 = arith.constant 0 : index
    %c0_5 = arith.constant 0 : index
    %6 = vector.load %arg1[%c1, %c0_4, %c0_5] : memref<4x32x32xf32, #tpu.memory_space<vmem>>, vector<1x32x32xf32>
    %7 = vector.shape_cast %6 : vector<1x32x32xf32> to vector<32x32xf32>
    %cst_6 = arith.constant dense<0.000000e+00> : vector<8x32xf32>
    %8 = tpu.matmul %5, %7, %cst_6 {dimension_numbers = #tpu.dot_dimension_numbers<[1], [0], [0], [1], [0, 0, 1, 1], [], []>} : vector<8x32xf32>, vector<32x32xf32>, vector<8x32xf32> -> vector<8x32xf32>
    %9 = vector.extract_strided_slice %0 {offsets = [16, 0], sizes = [8, 32], strides = [1, 1]} : vector<32x32xf32> to vector<8x32xf32>
    %c2 = arith.constant 2 : index
    %c0_7 = arith.constant 0 : index
    %c0_8 = arith.constant 0 : index
    %10 = vector.load %arg1[%c2, %c0_7, %c0_8] : memref<4x32x32xf32, #tpu.memory_space<vmem>>, vector<1x32x32xf32>
    %11 = vector.shape_cast %10 : vector<1x32x32xf32> to vector<32x32xf32>
    %cst_9 = arith.constant dense<0.000000e+00> : vector<8x32xf32>
    %12 = tpu.matmul %9, %11, %cst_9 {dimension_numbers = #tpu.dot_dimension_numbers<[1], [0], [0], [1], [0, 0, 1, 1], [], []>} : vector<8x32xf32>, vector<32x32xf32>, vector<8x32xf32> -> vector<8x32xf32>
    %13 = vector.extract_strided_slice %0 {offsets = [24, 0], sizes = [8, 32], strides = [1, 1]} : vector<32x32xf32> to vector<8x32xf32>
    %c3 = arith.constant 3 : index
    %c0_10 = arith.constant 0 : index
    %c0_11 = arith.constant 0 : index
    %14 = vector.load %arg1[%c3, %c0_10, %c0_11] : memref<4x32x32xf32, #tpu.memory_space<vmem>>, vector<1x32x32xf32>
    %15 = vector.shape_cast %14 : vector<1x32x32xf32> to vector<32x32xf32>
    %cst_12 = arith.constant dense<0.000000e+00> : vector<8x32xf32>
    %16 = tpu.matmul %13, %15, %cst_12 {dimension_numbers = #tpu.dot_dimension_numbers<[1], [0], [0], [1], [0, 0, 1, 1], [], []>} : vector<8x32xf32>, vector<32x32xf32>, vector<8x32xf32> -> vector<8x32xf32>
    %17 = tpu.concatenate %4, %8, %12, %16 in 0 : vector<8x32xf32>, vector<8x32xf32>, vector<8x32xf32>, vector<8x32xf32> -> vector<32x32xf32>
    %cst_13 = arith.constant dense<0.000000e+00> : vector<32xf32>
    %18 = vector.multi_reduction <add>, %17, %cst_13 [0] : vector<32x32xf32> to vector<32xf32>
    %19 = vector.shape_cast %18 : vector<32xf32> to vector<1x32xf32>
    %cst_14 = arith.constant 3.125000e-02 : f32
    %20 = vector.broadcast %cst_14 : f32 to vector<1x32xf32>
    %21 = arith.mulf %19, %20 : vector<1x32xf32>
    %22 = arith.mulf %17, %17 : vector<32x32xf32>
    %cst_15 = arith.constant dense<0.000000e+00> : vector<32xf32>
    %23 = vector.multi_reduction <add>, %22, %cst_15 [0] : vector<32x32xf32> to vector<32xf32>
    %24 = vector.shape_cast %23 : vector<32xf32> to vector<1x32xf32>
    %cst_16 = arith.constant 3.125000e-02 : f32
    %25 = vector.broadcast %cst_16 : f32 to vector<1x32xf32>
    %26 = arith.mulf %24, %25 : vector<1x32xf32>
    %c0_17 = arith.constant 0 : index
    %c0_18 = arith.constant 0 : index
    %27 = vector.load %arg3[%c0_17, %c0_18] : memref<1x32xf32, #tpu.memory_space<vmem>>, vector<1x32xf32>
    %28 = arith.mulf %21, %21 : vector<1x32xf32>
    %29 = arith.subf %26, %28 : vector<1x32xf32>
    %cst_19 = arith.constant 9.99999974E-6 : f32
    %30 = vector.broadcast %cst_19 : f32 to vector<1x32xf32>
    %31 = arith.addf %29, %30 : vector<1x32xf32>
    %32 = math.rsqrt %31 : vector<1x32xf32>
    %33 = arith.mulf %27, %32 : vector<1x32xf32>
    %c0_20 = arith.constant 0 : index
    %c0_21 = arith.constant 0 : index
    %34 = vector.load %arg4[%c0_20, %c0_21] : memref<1x32xf32, #tpu.memory_space<vmem>>, vector<1x32xf32>
    %35 = arith.mulf %21, %33 : vector<1x32xf32>
    %36 = arith.subf %34, %35 : vector<1x32xf32>
    %37 = vector.broadcast %33 : vector<1x32xf32> to vector<32x32xf32>
    %38 = arith.mulf %17, %37 : vector<32x32xf32>
    %39 = vector.broadcast %36 : vector<1x32xf32> to vector<32x32xf32>
    %40 = arith.addf %38, %39 : vector<32x32xf32>
    %cst_22 = arith.constant 0.000000e+00 : f32
    %41 = vector.broadcast %cst_22 : f32 to vector<32x32xf32>
    %42 = arith.maximumf %40, %41 : vector<32x32xf32>
    %43 = vector.extract_strided_slice %42 {offsets = [0, 0], sizes = [8, 32], strides = [1, 1]} : vector<32x32xf32> to vector<8x32xf32>
    %c0_23 = arith.constant 0 : index
    %c0_24 = arith.constant 0 : index
    %c0_25 = arith.constant 0 : index
    %44 = vector.load %arg2[%c0_23, %c0_24, %c0_25] : memref<4x32x32xf32, #tpu.memory_space<vmem>>, vector<1x32x32xf32>
    %45 = vector.shape_cast %44 : vector<1x32x32xf32> to vector<32x32xf32>
    %cst_26 = arith.constant dense<0.000000e+00> : vector<8x32xf32>
    %46 = tpu.matmul %43, %45, %cst_26 {dimension_numbers = #tpu.dot_dimension_numbers<[1], [0], [0], [1], [0, 0, 1, 1], [], []>} : vector<8x32xf32>, vector<32x32xf32>, vector<8x32xf32> -> vector<8x32xf32>
    %47 = vector.extract_strided_slice %42 {offsets = [8, 0], sizes = [8, 32], strides = [1, 1]} : vector<32x32xf32> to vector<8x32xf32>
    %c1_27 = arith.constant 1 : index
    %c0_28 = arith.constant 0 : index
    %c0_29 = arith.constant 0 : index
    %48 = vector.load %arg2[%c1_27, %c0_28, %c0_29] : memref<4x32x32xf32, #tpu.memory_space<vmem>>, vector<1x32x32xf32>
    %49 = vector.shape_cast %48 : vector<1x32x32xf32> to vector<32x32xf32>
    %cst_30 = arith.constant dense<0.000000e+00> : vector<8x32xf32>
    %50 = tpu.matmul %47, %49, %cst_30 {dimension_numbers = #tpu.dot_dimension_numbers<[1], [0], [0], [1], [0, 0, 1, 1], [], []>} : vector<8x32xf32>, vector<32x32xf32>, vector<8x32xf32> -> vector<8x32xf32>
    %51 = vector.extract_strided_slice %42 {offsets = [16, 0], sizes = [8, 32], strides = [1, 1]} : vector<32x32xf32> to vector<8x32xf32>
    %c2_31 = arith.constant 2 : index
    %c0_32 = arith.constant 0 : index
    %c0_33 = arith.constant 0 : index
    %52 = vector.load %arg2[%c2_31, %c0_32, %c0_33] : memref<4x32x32xf32, #tpu.memory_space<vmem>>, vector<1x32x32xf32>
    %53 = vector.shape_cast %52 : vector<1x32x32xf32> to vector<32x32xf32>
    %cst_34 = arith.constant dense<0.000000e+00> : vector<8x32xf32>
    %54 = tpu.matmul %51, %53, %cst_34 {dimension_numbers = #tpu.dot_dimension_numbers<[1], [0], [0], [1], [0, 0, 1, 1], [], []>} : vector<8x32xf32>, vector<32x32xf32>, vector<8x32xf32> -> vector<8x32xf32>
    %55 = vector.extract_strided_slice %42 {offsets = [24, 0], sizes = [8, 32], strides = [1, 1]} : vector<32x32xf32> to vector<8x32xf32>
    %c3_35 = arith.constant 3 : index
    %c0_36 = arith.constant 0 : index
    %c0_37 = arith.constant 0 : index
    %56 = vector.load %arg2[%c3_35, %c0_36, %c0_37] : memref<4x32x32xf32, #tpu.memory_space<vmem>>, vector<1x32x32xf32>
    %57 = vector.shape_cast %56 : vector<1x32x32xf32> to vector<32x32xf32>
    %cst_38 = arith.constant dense<0.000000e+00> : vector<8x32xf32>
    %58 = tpu.matmul %55, %57, %cst_38 {dimension_numbers = #tpu.dot_dimension_numbers<[1], [0], [0], [1], [0, 0, 1, 1], [], []>} : vector<8x32xf32>, vector<32x32xf32>, vector<8x32xf32> -> vector<8x32xf32>
    %59 = tpu.concatenate %46, %50, %54, %58 in 0 : vector<8x32xf32>, vector<8x32xf32>, vector<8x32xf32>, vector<8x32xf32> -> vector<32x32xf32>
    %cst_39 = arith.constant dense<0.000000e+00> : vector<32xf32>
    %60 = vector.multi_reduction <add>, %59, %cst_39 [0] : vector<32x32xf32> to vector<32xf32>
    %61 = vector.shape_cast %60 : vector<32xf32> to vector<1x32xf32>
    %cst_40 = arith.constant 3.125000e-02 : f32
    %62 = vector.broadcast %cst_40 : f32 to vector<1x32xf32>
    %63 = arith.mulf %61, %62 : vector<1x32xf32>
    %64 = arith.mulf %59, %59 : vector<32x32xf32>
    %cst_41 = arith.constant dense<0.000000e+00> : vector<32xf32>
    %65 = vector.multi_reduction <add>, %64, %cst_41 [0] : vector<32x32xf32> to vector<32xf32>
    %66 = vector.shape_cast %65 : vector<32xf32> to vector<1x32xf32>
    %cst_42 = arith.constant 3.125000e-02 : f32
    %67 = vector.broadcast %cst_42 : f32 to vector<1x32xf32>
    %68 = arith.mulf %66, %67 : vector<1x32xf32>
    %c0_43 = arith.constant 0 : index
    %c0_44 = arith.constant 0 : index
    %69 = vector.load %arg5[%c0_43, %c0_44] : memref<1x32xf32, #tpu.memory_space<vmem>>, vector<1x32xf32>
    %70 = arith.mulf %63, %63 : vector<1x32xf32>
    %71 = arith.subf %68, %70 : vector<1x32xf32>
    %cst_45 = arith.constant 9.99999974E-6 : f32
    %72 = vector.broadcast %cst_45 : f32 to vector<1x32xf32>
    %73 = arith.addf %71, %72 : vector<1x32xf32>
    %74 = math.rsqrt %73 : vector<1x32xf32>
    %75 = arith.mulf %69, %74 : vector<1x32xf32>
    %c0_46 = arith.constant 0 : index
    %c0_47 = arith.constant 0 : index
    %76 = vector.load %arg6[%c0_46, %c0_47] : memref<1x32xf32, #tpu.memory_space<vmem>>, vector<1x32xf32>
    %77 = arith.mulf %63, %75 : vector<1x32xf32>
    %78 = arith.subf %76, %77 : vector<1x32xf32>
    %79 = vector.broadcast %75 : vector<1x32xf32> to vector<32x32xf32>
    %80 = arith.mulf %59, %79 : vector<32x32xf32>
    %81 = vector.broadcast %78 : vector<1x32xf32> to vector<32x32xf32>
    %82 = arith.addf %80, %81 : vector<32x32xf32>
    %83 = arith.addf %82, %0 : vector<32x32xf32>
    %cst_48 = arith.constant 0.000000e+00 : f32
    %84 = vector.broadcast %cst_48 : f32 to vector<32x32xf32>
    %85 = arith.maximumf %83, %84 : vector<32x32xf32>
    %c0_49 = arith.constant 0 : index
    %c0_50 = arith.constant 0 : index
    %86 = vector.load %arg7[%c0_49, %c0_50] : memref<32x32xf32, #tpu.memory_space<vmem>>, vector<32x32xf32>
    tpu.vector_store %arg7[%c0_49, %c0_50], %85 {strides = array<i32>} : memref<32x32xf32, #tpu.memory_space<vmem>>, vector<32x32xf32>,
    return
  }
}

</mosaic_0001>

<llo_original>
// kernel: residual_block_pallas.1
$region0: #{residual_block_pallas.1}
  #allocation0 [shape = 'u32[]', space=smem, size = 0x4, offset = 0x4, fixed_abs, tag = 'smem constant byte address 0x4 - core index']
  #allocation1 [shape = 'u32[144,128]{1,0:T(1,128)}', space=vmem, size = 0x12000, scoped, tag = 'internal scratch']
  %s0 = inlined_call_operand.hbm [shape: f32[32,32], index: 0, kind: input, shape index: {}]
  %s1 = inlined_call_operand.hbm [shape: f32[4,32,32], index: 1, kind: input, shape index: {}]
  %s2 = inlined_call_operand.hbm [shape: f32[4,32,32], index: 2, kind: input, shape index: {}]
  %s3 = inlined_call_operand.vmem [shape: f32[1,32], index: 3, kind: input, shape index: {}]
  %s4 = inlined_call_operand.vmem [shape: f32[1,32], index: 4, kind: input, shape index: {}]
  %s5 = inlined_call_operand.vmem [shape: f32[1,32], index: 5, kind: input, shape index: {}]
  %s6 = inlined_call_operand.vmem [shape: f32[1,32], index: 6, kind: input, shape index: {}]
  %s7 = inlined_call_operand.hbm [shape: f32[32,32], index: 7, kind: output, shape index: {}]
  %s8 = sld [smem:[#allocation0]]
  $region50: #{residual_block_pallas.1} parent=0
    _
  %s10 = ssub.s32 1, %s8
  %s11 = scalar_select 0, %s10, %s8
  $region1: #{residual_block_pallas.1} parent=0
    #allocation2 [shape = 'u8[16384]{0}', space=vmem, size = 0x4000, scoped, tag = 'input window, operand 0, single buffered']
    #allocation3 [shape = 's32[1]{0}', space=sflag, size = 0x4, scoped, tag = 'scoped memory for residual_block_pallas.1']
    #allocation4 [shape = 's32[1]{0}', space=sflag, size = 0x4, scoped, tag = 'scoped memory for residual_block_pallas.1']
    #allocation5 [shape = 'u8[65536]{0}', space=vmem, size = 0x10000, scoped, tag = 'input window, operand 1, single buffered']
    #allocation6 [shape = 's32[1]{0}', space=sflag, size = 0x4, scoped, tag = 'scoped memory for residual_block_pallas.1']
    #allocation7 [shape = 'u8[65536]{0}', space=vmem, size = 0x10000, scoped, tag = 'input window, operand 2, single buffered']
    #allocation8 [shape = 'u8[16384]{0}', space=vmem, size = 0x4000, scoped, tag = 'output window, operand 0, single buffered']
    %12 = vsyncpa [#allocation3], 0
    %13 = vsyncpa [#allocation6], 0
    %14 = vsyncpa [#allocation4], 0
    // Predicated region
    $region2: #{residual_block_pallas.1} parent=1 // pred_check
      _
    $region3: #{residual_block_pallas.1} parent=1 // pred_check_branch
      %16 = sbr.rel (0) target = $region5
    $region4: #{residual_block_pallas.1} parent=1 // pred_region
      %s18 = ssub.s32 512, 512
      %19 = vsyncadd [#allocation3], %s18
      %s20 = sshll.u32 [#allocation2], 4
      %s21 = int_to_ptr.vmem [resolvable:$true] %s20
      %26 = dma.hbm_to_vmem [thread:$0]  %s0, 512, %s21, [#allocation3], 128, 128, 8
    $region5: #{residual_block_pallas.1} parent=1 // pred_fallthru
      _
    // Predicated region
    $region6: #{residual_block_pallas.1} parent=1 // pred_check
      _
    $region7: #{residual_block_pallas.1} parent=1 // pred_check_branch
      %28 = sbr.rel (0) target = $region9
    $region8: #{residual_block_pallas.1} parent=1 // pred_region
      %s30 = ssub.s32 2048, 2048
      %31 = vsyncadd [#allocation6], %s30
      %s32 = sshll.u32 [#allocation5], 4
      %s33 = int_to_ptr.vmem [resolvable:$true] %s32
      %38 = dma.hbm_to_vmem [thread:$0]  %s1, 2048, %s33, [#allocation6], 128, 128, 8
    $region9: #{residual_block_pallas.1} parent=1 // pred_fallthru
      _
    // Predicated region
    $region10: #{residual_block_pallas.1} parent=1 // pred_check
      _
    $region11: #{residual_block_pallas.1} parent=1 // pred_check_branch
      %40 = sbr.rel (0) target = $region13
    $region12: #{residual_block_pallas.1} parent=1 // pred_region
      %s42 = ssub.s32 2048, 2048
      %43 = vsyncadd [#allocation6], %s42
      %s44 = sshll.u32 [#allocation7], 4
      %s45 = int_to_ptr.vmem [resolvable:$true] %s44
      %50 = dma.hbm_to_vmem [thread:$0]  %s2, 2048, %s45, [#allocation6], 128, 128, 8
    $region13: #{residual_block_pallas.1} parent=1 // pred_fallthru
      _
    // Predicated region
    $region14: #{residual_block_pallas.1} parent=1 // pred_check
      _
    $region15: #{residual_block_pallas.1} parent=1 // pred_check_branch
      %52 = sbr.rel (0) target = $region17
    $region16: #{residual_block_pallas.1} parent=1 // pred_region
      _
    $region17: #{residual_block_pallas.1} parent=1 // pred_fallthru
      _
    // Predicated region
    $region18: #{residual_block_pallas.1} parent=1 // pred_check
      _
    $region19: #{residual_block_pallas.1} parent=1 // pred_check_branch
      %54 = sbr.rel (0) target = $region21
    $region20: #{residual_block_pallas.1} parent=1 // pred_region
      _
    $region21: #{residual_block_pallas.1} parent=1 // pred_fallthru
      _
    // Predicated region
    $region22: #{residual_block_pallas.1} parent=1 // pred_check
      _
    $region23: #{residual_block_pallas.1} parent=1 // pred_check_branch
      %56 = sbr.rel (0) target = $region25
    $region24: #{residual_block_pallas.1} parent=1 // pred_region
      _
    $region25: #{residual_block_pallas.1} parent=1 // pred_fallthru
      _
    // Predicated region
    $region26: #{residual_block_pallas.1} parent=1 // pred_check
      _
    $region27: #{residual_block_pallas.1} parent=1 // pred_check_branch
      %58 = sbr.rel (0) target = $region29
    $region28: #{residual_block_pallas.1} parent=1 // pred_region
      _
    $region29: #{residual_block_pallas.1} parent=1 // pred_fallthru
      _
    // Predicated region
    $region30: #{residual_block_pallas.1} parent=1 // pred_check
      _
    $region31: #{residual_block_pallas.1} parent=1 // pred_check_branch
      %60 = sbr.rel (0) target = $region33
    $region32: #{residual_block_pallas.1} parent=1 // pred_region
      %61 = dma.done [#allocation3], 512
    $region33: #{residual_block_pallas.1} parent=1 // pred_fallthru
      _
    // Predicated region
    $region34: #{residual_block_pallas.1} parent=1 // pred_check
      _
    $region35: #{residual_block_pallas.1} parent=1 // pred_check_branch
      %63 = sbr.rel (0) target = $region37
    $region36: #{residual_block_pallas.1} parent=1 // pred_region
      %64 = dma.done [#allocation6], 2048
    $region37: #{residual_block_pallas.1} parent=1 // pred_fallthru
      _
    // Predicated region
    $region38: #{residual_block_pallas.1} parent=1 // pred_check
      _
    $region39: #{residual_block_pallas.1} parent=1 // pred_check_branch
      %66 = sbr.rel (0) target = $region41
    $region40: #{residual_block_pallas.1} parent=1 // pred_region
      %67 = dma.done [#allocation6], 2048
    $region41: #{residual_block_pallas.1} parent=1 // pred_fallthru
      _
    %v68 = vld [vmem:[#allocation2] sm:$0xff]
    %v69 = vld [vmem:[#allocation2 + $0x8] sm:$0xff]
    %v70 = vld [vmem:[#allocation2 + $0x10] sm:$0xff]
    %v71 = vld [vmem:[#allocation2 + $0x18] sm:$0xff]
    %v72 = vld [vmem:[#allocation5] sm:$0xff]
    %v73 = vld [vmem:[#allocation5 + $0x8] sm:$0xff]
    %v74 = vld [vmem:[#allocation5 + $0x10] sm:$0xff]
    %v75 = vld [vmem:[#allocation5 + $0x18] sm:$0xff]
    %vm76 = vcmask 261120
    %v78 = vsel %vm76, %v68, 0
    %80 = vmatprep.subr.mxu0 0.0
    %81 = vmatpush1.msra.mxu0 %v72
    %82 = vmatprep.subr.mxu0 0.0
    %83 = vmatpush1.msra.mxu0 %v73
    %84 = vmatprep.subr.mxu0 0.0
    %85 = vmatpush1.msra.mxu0 %v74
    %86 = vmatprep.subr.mxu0 0.0
    %87 = vmatpush1.msra.mxu0 %v75
    %88 = vmatprep.subr.mxu0 0.0
    %89 = vmatpush1.msra.mxu0 0.0
    %90 = vmatprep.subr.mxu0 0.0
    %91 = vmatpush1.msra.mxu0 0.0
    %92 = vmatprep.subr.mxu0 0.0
    %93 = vmatpush1.msra.mxu0 0.0
    %94 = vmatprep.subr.mxu0 0.0
    %95 = vmatpush1.msra.mxu0 0.0
    %96 = vmatprep.subr.mxu0 0.0
    %97 = vmatpush1.msra.mxu0 0.0
    %98 = vmatprep.subr.mxu0 0.0
    %99 = vmatpush1.msra.mxu0 0.0
    %100 = vmatprep.subr.mxu0 0.0
    %101 = vmatpush1.msra.mxu0 0.0
    %102 = vmatprep.subr.mxu0 0.0
    %103 = vmatpush1.msra.mxu0 0.0
    %104 = vmatprep.subr.mxu0 0.0
    %105 = vmatpush1.msra.mxu0 0.0
    %106 = vmatprep.subr.mxu0 0.0
    %107 = vmatpush1.msra.mxu0 0.0
    %108 = vmatprep.subr.mxu0 0.0
    %109 = vmatpush1.msra.mxu0 0.0
    %110 = vmatprep.subr.mxu0 0.0
    %111 = vmatpush1.msra.mxu0 0.0
    %112 = vmatprep.subr.mxu0 0.0
    %113 = vmatpush1.msra.mxu0 0.0
    %114 = vmatprep.subr.mxu0 0.0
    %115 = vmatpush1.msra.mxu0 0.0
    %116 = vmatprep.subr.mxu0 0.0
    %117 = vmatpush1.msra.mxu0 0.0
    %118 = vmatprep.subr.mxu0 0.0
    %119 = vmatpush1.msra.mxu0 0.0
    %120 = vmatprep.subr.mxu0 0.0
    %121 = vmatpush1.msra.mxu0 0.0
    %122 = vmatprep.subr.mxu0 0.0
    %123 = vmatpush1.msra.mxu0 0.0
    %124 = vmatprep.subr.mxu0 0.0
    %125 = vmatpush1.msra.mxu0 0.0
    %126 = vmatprep.subr.mxu0 0.0
    %127 = vmatpush1.msra.mxu0 0.0
    %128 = vmatprep.subr.mxu0 0.0
    %129 = vmatpush1.msra.mxu0 0.0
    %130 = vmatprep.subr.mxu0 0.0
    %131 = vmatpush1.msra.mxu0 0.0
    %132 = vmatprep.subr.mxu0 0.0
    %133 = vmatpush1.msra.mxu0 0.0
    %134 = vmatprep.subr.mxu0 0.0
    %135 = vmatpush1.msra.mxu0 0.0
    %136 = vmatprep.subr.mxu0 0.0
    %137 = vmatpush1.msra.mxu0 0.0
    %138 = vmatprep.subr.mxu0 0.0
    %139 = vmatpush1.msra.mxu0 0.0
    %140 = vmatprep.subr.mxu0 0.0
    %141 = vmatpush1.msra.mxu0 0.0
    %142 = vmatprep.subr.mxu0 0.0
    %143 = vmatpush1.msra.mxu0 0.0
    %144 = vmatprep.mubr.f32.mxu0 0.0
    %145 = vmatmul.mubr.f32.gmra.mrb[0].mxu0 %v78
    %v146 = vpop.f32.mrb[0].mxu0
    %v147 = vadd.f32 0.0, %v146
    %v148 = vpop.f32.mrb[0].mxu0
    %149 = vdwg.mxu0
    %s150 = scalar_lea.vmem [#allocation5], 32
    %v151 = vld [vmem:[%s150] sm:$0xff]
    %v152 = vld [vmem:[%s150 + $0x8] sm:$0xff]
    %v153 = vld [vmem:[%s150 + $0x10] sm:$0xff]
    %v154 = vld [vmem:[%s150 + $0x18] sm:$0xff]
    %v156 = vsel %vm76, %v69, 0
    %158 = vmatprep.subr.mxu0 0.0
    %159 = vmatpush1.msra.mxu0 %v151
    %160 = vmatprep.subr.mxu0 0.0
    %161 = vmatpush1.msra.mxu0 %v152
    %162 = vmatprep.subr.mxu0 0.0
    %163 = vmatpush1.msra.mxu0 %v153
    %164 = vmatprep.subr.mxu0 0.0
    %165 = vmatpush1.msra.mxu0 %v154
    %166 = vmatprep.subr.mxu0 0.0
    %167 = vmatpush1.msra.mxu0 0.0
    %168 = vmatprep.subr.mxu0 0.0
    %169 = vmatpush1.msra.mxu0 0.0
    %170 = vmatprep.subr.mxu0 0.0
    %171 = vmatpush1.msra.mxu0 0.0
    %172 = vmatprep.subr.mxu0 0.0
    %173 = vmatpush1.msra.mxu0 0.0
    %174 = vmatprep.subr.mxu0 0.0
    %175 = vmatpush1.msra.mxu0 0.0
    %176 = vmatprep.subr.mxu0 0.0
    %177 = vmatpush1.msra.mxu0 0.0
    %178 = vmatprep.subr.mxu0 0.0
    %179 = vmatpush1.msra.mxu0 0.0
    %180 = vmatprep.subr.mxu0 0.0
    %181 = vmatpush1.msra.mxu0 0.0
    %182 = vmatprep.subr.mxu0 0.0
    %183 = vmatpush1.msra.mxu0 0.0
    %184 = vmatprep.subr.mxu0 0.0
    %185 = vmatpush1.msra.mxu0 0.0
    %186 = vmatprep.subr.mxu0 0.0
    %187 = vmatpush1.msra.mxu0 0.0
    %188 = vmatprep.subr.mxu0 0.0
    %189 = vmatpush1.msra.mxu0 0.0
    %190 = vmatprep.subr.mxu0 0.0
    %191 = vmatpush1.msra.mxu0 0.0
    %192 = vmatprep.subr.mxu0 0.0
    %193 = vmatpush1.msra.mxu0 0.0
    %194 = vmatprep.subr.mxu0 0.0
    %195 = vmatpush1.msra.mxu0 0.0
    %196 = vmatprep.subr.mxu0 0.0
    %197 = vmatpush1.msra.mxu0 0.0
    %198 = vmatprep.subr.mxu0 0.0
    %199 = vmatpush1.msra.mxu0 0.0
    %200 = vmatprep.subr.mxu0 0.0
    %201 = vmatpush1.msra.mxu0 0.0
    %202 = vmatprep.subr.mxu0 0.0
    %203 = vmatpush1.msra.mxu0 0.0
    %204 = vmatprep.subr.mxu0 0.0
    %205 = vmatpush1.msra.mxu0 0.0
    %206 = vmatprep.subr.mxu0 0.0
    %207 = vmatpush1.msra.mxu0 0.0
    %208 = vmatprep.subr.mxu0 0.0
    %209 = vmatpush1.msra.mxu0 0.0
    %210 = vmatprep.subr.mxu0 0.0
    %211 = vmatpush1.msra.mxu0 0.0
    %212 = vmatprep.subr.mxu0 0.0
    %213 = vmatpush1.msra.mxu0 0.0
    %214 = vmatprep.subr.mxu0 0.0
    %215 = vmatpush1.msra.mxu0 0.0
    %216 = vmatprep.subr.mxu0 0.0
    %217 = vmatpush1.msra.mxu0 0.0
    %218 = vmatprep.subr.mxu0 0.0
    %219 = vmatpush1.msra.mxu0 0.0
    %220 = vmatprep.subr.mxu0 0.0
    %221 = vmatpush1.msra.mxu0 0.0
    %222 = vmatprep.mubr.f32.mxu0 0.0
    %223 = vmatmul.mubr.f32.gmra.mrb[0].mxu0 %v156
    %v224 = vpop.f32.mrb[0].mxu0
    %v225 = vadd.f32 0.0, %v224
    %v226 = vpop.f32.mrb[0].mxu0
    %227 = vdwg.mxu0
    %s228 = scalar_lea.vmem [#allocation5], 64
    %v229 = vld [vmem:[%s228] sm:$0xff]
    %v230 = vld [vmem:[%s228 + $0x8] sm:$0xff]
    %v231 = vld [vmem:[%s228 + $0x10] sm:$0xff]
    %v232 = vld [vmem:[%s228 + $0x18] sm:$0xff]
    %v234 = vsel %vm76, %v70, 0
    %236 = vmatprep.subr.mxu0 0.0
    %237 = vmatpush1.msra.mxu0 %v229
    %238 = vmatprep.subr.mxu0 0.0
    %239 = vmatpush1.msra.mxu0 %v230
    %240 = vmatprep.subr.mxu0 0.0
    %241 = vmatpush1.msra.mxu0 %v231
    %242 = vmatprep.subr.mxu0 0.0
    %243 = vmatpush1.msra.mxu0 %v232
    %244 = vmatprep.subr.mxu0 0.0
    %245 = vmatpush1.msra.mxu0 0.0
    %246 = vmatprep.subr.mxu0 0.0
    %247 = vmatpush1.msra.mxu0 0.0
    %248 = vmatprep.subr.mxu0 0.0
    %249 = vmatpush1.msra.mxu0 0.0
    %250 = vmatprep.subr.mxu0 0.0
    %251 = vmatpush1.msra.mxu0 0.0
    %252 = vmatprep.subr.mxu0 0.0
    %253 = vmatpush1.msra.mxu0 0.0
    %254 = vmatprep.subr.mxu0 0.0
    %255 = vmatpush1.msra.mxu0 0.0
    %256 = vmatprep.subr.mxu0 0.0
    %257 = vmatpush1.msra.mxu0 0.0
    %258 = vmatprep.subr.mxu0 0.0
    %259 = vmatpush1.msra.mxu0 0.0
    %260 = vmatprep.subr.mxu0 0.0
    %261 = vmatpush1.msra.mxu0 0.0
    %262 = vmatprep.subr.mxu0 0.0
    %263 = vmatpush1.msra.mxu0 0.0
    %264 = vmatprep.subr.mxu0 0.0
    %265 = vmatpush1.msra.mxu0 0.0
    %266 = vmatprep.subr.mxu0 0.0
    %267 = vmatpush1.msra.mxu0 0.0
    %268 = vmatprep.subr.mxu0 0.0
    %269 = vmatpush1.msra.mxu0 0.0
    %270 = vmatprep.subr.mxu0 0.0
    %271 = vmatpush1.msra.mxu0 0.0
    %272 = vmatprep.subr.mxu0 0.0
    %273 = vmatpush1.msra.mxu0 0.0
    %274 = vmatprep.subr.mxu0 0.0
    %275 = vmatpush1.msra.mxu0 0.0
    %276 = vmatprep.subr.mxu0 0.0
    %277 = vmatpush1.msra.mxu0 0.0
    %278 = vmatprep.subr.mxu0 0.0
    %279 = vmatpush1.msra.mxu0 0.0
    %280 = vmatprep.subr.mxu0 0.0
    %281 = vmatpush1.msra.mxu0 0.0
    %282 = vmatprep.subr.mxu0 0.0
    %283 = vmatpush1.msra.mxu0 0.0
    %284 = vmatprep.subr.mxu0 0.0
    %285 = vmatpush1.msra.mxu0 0.0
    %286 = vmatprep.subr.mxu0 0.0
    %287 = vmatpush1.msra.mxu0 0.0
    %288 = vmatprep.subr.mxu0 0.0
    %289 = vmatpush1.msra.mxu0 0.0
    %290 = vmatprep.subr.mxu0 0.0
    %291 = vmatpush1.msra.mxu0 0.0
    %292 = vmatprep.subr.mxu0 0.0
    %293 = vmatpush1.msra.mxu0 0.0
    %294 = vmatprep.subr.mxu0 0.0
    %295 = vmatpush1.msra.mxu0 0.0
    %296 = vmatprep.subr.mxu0 0.0
    %297 = vmatpush1.msra.mxu0 0.0
    %298 = vmatprep.subr.mxu0 0.0
    %299 = vmatpush1.msra.mxu0 0.0
    %300 = vmatprep.mubr.f32.mxu0 0.0
    %301 = vmatmul.mubr.f32.gmra.mrb[0].mxu0 %v234
    %v302 = vpop.f32.mrb[0].mxu0
    %v303 = vadd.f32 0.0, %v302
    %v304 = vpop.f32.mrb[0].mxu0
    %305 = vdwg.mxu0
    %s306 = scalar_lea.vmem [#allocation5], 96
    %v307 = vld [vmem:[%s306] sm:$0xff]
    %v308 = vld [vmem:[%s306 + $0x8] sm:$0xff]
    %v309 = vld [vmem:[%s306 + $0x10] sm:$0xff]
    %v310 = vld [vmem:[%s306 + $0x18] sm:$0xff]
    %v312 = vsel %vm76, %v71, 0
    %314 = vmatprep.subr.mxu0 0.0
    %315 = vmatpush1.msra.mxu0 %v307
    %316 = vmatprep.subr.mxu0 0.0
    %317 = vmatpush1.msra.mxu0 %v308
    %318 = vmatprep.subr.mxu0 0.0
    %319 = vmatpush1.msra.mxu0 %v309
    %320 = vmatprep.subr.mxu0 0.0
    %321 = vmatpush1.msra.mxu0 %v310
    %322 = vmatprep.subr.mxu0 0.0
    %323 = vmatpush1.msra.mxu0 0.0
    %324 = vmatprep.subr.mxu0 0.0
    %325 = vmatpush1.msra.mxu0 0.0
    %326 = vmatprep.subr.mxu0 0.0
    %327 = vmatpush1.msra.mxu0 0.0
    %328 = vmatprep.subr.mxu0 0.0
    %329 = vmatpush1.msra.mxu0 0.0
    %330 = vmatprep.subr.mxu0 0.0
    %331 = vmatpush1.msra.mxu0 0.0
    %332 = vmatprep.subr.mxu0 0.0
    %333 = vmatpush1.msra.mxu0 0.0
    %334 = vmatprep.subr.mxu0 0.0
    %335 = vmatpush1.msra.mxu0 0.0
    %336 = vmatprep.subr.mxu0 0.0
    %337 = vmatpush1.msra.mxu0 0.0
    %338 = vmatprep.subr.mxu0 0.0
    %339 = vmatpush1.msra.mxu0 0.0
    %340 = vmatprep.subr.mxu0 0.0
    %341 = vmatpush1.msra.mxu0 0.0
    %342 = vmatprep.subr.mxu0 0.0
    %343 = vmatpush1.msra.mxu0 0.0
    %344 = vmatprep.subr.mxu0 0.0
    %345 = vmatpush1.msra.mxu0 0.0
    %346 = vmatprep.subr.mxu0 0.0
    %347 = vmatpush1.msra.mxu0 0.0
    %348 = vmatprep.subr.mxu0 0.0
    %349 = vmatpush1.msra.mxu0 0.0
    %350 = vmatprep.subr.mxu0 0.0
    %351 = vmatpush1.msra.mxu0 0.0
    %352 = vmatprep.subr.mxu0 0.0
    %353 = vmatpush1.msra.mxu0 0.0
    %354 = vmatprep.subr.mxu0 0.0
    %355 = vmatpush1.msra.mxu0 0.0
    %356 = vmatprep.subr.mxu0 0.0
    %357 = vmatpush1.msra.mxu0 0.0
    %358 = vmatprep.subr.mxu0 0.0
    %359 = vmatpush1.msra.mxu0 0.0
    %360 = vmatprep.subr.mxu0 0.0
    %361 = vmatpush1.msra.mxu0 0.0
    %362 = vmatprep.subr.mxu0 0.0
    %363 = vmatpush1.msra.mxu0 0.0
    %364 = vmatprep.subr.mxu0 0.0
    %365 = vmatpush1.msra.mxu0 0.0
    %366 = vmatprep.subr.mxu0 0.0
    %367 = vmatpush1.msra.mxu0 0.0
    %368 = vmatprep.subr.mxu0 0.0
    %369 = vmatpush1.msra.mxu0 0.0
    %370 = vmatprep.subr.mxu0 0.0
    %371 = vmatpush1.msra.mxu0 0.0
    %372 = vmatprep.subr.mxu0 0.0
    %373 = vmatpush1.msra.mxu0 0.0
    %374 = vmatprep.subr.mxu0 0.0
    %375 = vmatpush1.msra.mxu0 0.0
    %376 = vmatprep.subr.mxu0 0.0
    %377 = vmatpush1.msra.mxu0 0.0
    %378 = vmatprep.mubr.f32.mxu0 0.0
    %379 = vmatmul.mubr.f32.gmra.mrb[0].mxu0 %v312
    %v380 = vpop.f32.mrb[0].mxu0
    %v381 = vadd.f32 0.0, %v380
    %v382 = vpop.f32.mrb[0].mxu0
    %383 = vdwg.mxu0
    %v384 = vsel %vm76, %v147, 0.0
    %v385 = vsel %vm76, %v225, 0.0
    %v386 = vadd.f32 %v384, %v385
    %v387 = vsel %vm76, %v303, 0.0
    %v388 = vadd.f32 %v386, %v387
    %v389 = vsel %vm76, %v381, 0.0
    %v390 = vadd.f32 %v388, %v389
    %v391 = vrot.slane %v390, 4
    %v392 = vadd.f32 %v390, %v391
    %v393 = vrot.slane %v392, 2
    %v394 = vadd.f32 %v392, %v393
    %v395 = vrot.slane %v394, 1
    %v396 = vadd.f32 %v394, %v395
    %v397 = vmul.f32 %v396, 0.03125
    %v398 = vmul.f32 %v147, %v147
    %v399 = vmul.f32 %v225, %v225
    %v400 = vmul.f32 %v303, %v303
    %v401 = vmul.f32 %v381, %v381
    %v402 = vsel %vm76, %v398, 0.0
    %v403 = vsel %vm76, %v399, 0.0
    %v404 = vadd.f32 %v402, %v403
    %v405 = vsel %vm76, %v400, 0.0
    %v406 = vadd.f32 %v404, %v405
    %v407 = vsel %vm76, %v401, 0.0
    %v408 = vadd.f32 %v406, %v407
    %v409 = vrot.slane %v408, 4
    %v410 = vadd.f32 %v408, %v409
    %v411 = vrot.slane %v410, 2
    %v412 = vadd.f32 %v410, %v411
    %v413 = vrot.slane %v412, 1
    %v414 = vadd.f32 %v412, %v413
    %v415 = vmul.f32 %v414, 0.03125
    %v416 = vld [vmem:[%s3] sm:$0x1]
    %v417 = vmul.f32 %v397, %v397
    %v418 = vsub.f32 %v415, %v417
    %v419 = vadd.f32 %v418, 1e-05
    %v420 = vrsqrt.pop %v419
    %v421 = vmul.f32 %v416, %v420
    %v422 = vld [vmem:[%s4] sm:$0x1]
    %v423 = vmul.f32 %v397, %v421
    %v424 = vsub.f32 %v422, %v423
    %v426 = vlaneseq
    %v427 = vshrl.u32 %v426, 7
    %v428 = vsub.s32 0, %v427
    %v429 = vrot.slane %v421, %v428
    %v431 = vmul.f32 %v147, %v429
    %v432 = vmul.f32 %v225, %v429
    %v433 = vmul.f32 %v303, %v429
    %v434 = vmul.f32 %v381, %v429
    %v436 = vlaneseq
    %v437 = vshrl.u32 %v436, 7
    %v438 = vsub.s32 0, %v437
    %v439 = vrot.slane %v424, %v438
    %v441 = vadd.f32 %v431, %v439
    %v442 = vadd.f32 %v432, %v439
    %v443 = vadd.f32 %v433, %v439
    %v444 = vadd.f32 %v434, %v439
    %v445 = vmax.f32 %v441, 0.0
    %v446 = vmax.f32 %v442, 0.0
    %v447 = vmax.f32 %v443, 0.0
    %v448 = vmax.f32 %v444, 0.0
    %v449 = vld [vmem:[#allocation7] sm:$0xff]
    %v450 = vld [vmem:[#allocation7 + $0x8] sm:$0xff]
    %v451 = vld [vmem:[#allocation7 + $0x10] sm:$0xff]
    %v452 = vld [vmem:[#allocation7 + $0x18] sm:$0xff]
    %v454 = vsel %vm76, %v445, 0
    %456 = vmatprep.subr.mxu0 0.0
    %457 = vmatpush1.msra.mxu0 %v449
    %458 = vmatprep.subr.mxu0 0.0
    %459 = vmatpush1.msra.mxu0 %v450
    %460 = vmatprep.subr.mxu0 0.0
    %461 = vmatpush1.msra.mxu0 %v451
    %462 = vmatprep.subr.mxu0 0.0
    %463 = vmatpush1.msra.mxu0 %v452
    %464 = vmatprep.subr.mxu0 0.0
    %465 = vmatpush1.msra.mxu0 0.0
    %466 = vmatprep.subr.mxu0 0.0
    %467 = vmatpush1.msra.mxu0 0.0
    %468 = vmatprep.subr.mxu0 0.0
    %469 = vmatpush1.msra.mxu0 0.0
    %470 = vmatprep.subr.mxu0 0.0
    %471 = vmatpush1.msra.mxu0 0.0
    %472 = vmatprep.subr.mxu0 0.0
    %473 = vmatpush1.msra.mxu0 0.0
    %474 = vmatprep.subr.mxu0 0.0
    %475 = vmatpush1.msra.mxu0 0.0
    %476 = vmatprep.subr.mxu0 0.0
    %477 = vmatpush1.msra.mxu0 0.0
    %478 = vmatprep.subr.mxu0 0.0
    %479 = vmatpush1.msra.mxu0 0.0
    %480 = vmatprep.subr.mxu0 0.0
    %481 = vmatpush1.msra.mxu0 0.0
    %482 = vmatprep.subr.mxu0 0.0
    %483 = vmatpush1.msra.mxu0 0.0
    %484 = vmatprep.subr.mxu0 0.0
    %485 = vmatpush1.msra.mxu0 0.0
    %486 = vmatprep.subr.mxu0 0.0
    %487 = vmatpush1.msra.mxu0 0.0
    %488 = vmatprep.subr.mxu0 0.0
    %489 = vmatpush1.msra.mxu0 0.0
    %490 = vmatprep.subr.mxu0 0.0
    %491 = vmatpush1.msra.mxu0 0.0
    %492 = vmatprep.subr.mxu0 0.0
    %493 = vmatpush1.msra.mxu0 0.0
    %494 = vmatprep.subr.mxu0 0.0
    %495 = vmatpush1.msra.mxu0 0.0
    %496 = vmatprep.subr.mxu0 0.0
    %497 = vmatpush1.msra.mxu0 0.0
    %498 = vmatprep.subr.mxu0 0.0
    %499 = vmatpush1.msra.mxu0 0.0
    %500 = vmatprep.subr.mxu0 0.0
    %501 = vmatpush1.msra.mxu0 0.0
    %502 = vmatprep.subr.mxu0 0.0
    %503 = vmatpush1.msra.mxu0 0.0
    %504 = vmatprep.subr.mxu0 0.0
    %505 = vmatpush1.msra.mxu0 0.0
    %506 = vmatprep.subr.mxu0 0.0
    %507 = vmatpush1.msra.mxu0 0.0
    %508 = vmatprep.subr.mxu0 0.0
    %509 = vmatpush1.msra.mxu0 0.0
    %510 = vmatprep.subr.mxu0 0.0
    %511 = vmatpush1.msra.mxu0 0.0
    %512 = vmatprep.subr.mxu0 0.0
    %513 = vmatpush1.msra.mxu0 0.0
    %514 = vmatprep.subr.mxu0 0.0
    %515 = vmatpush1.msra.mxu0 0.0
    %516 = vmatprep.subr.mxu0 0.0
    %517 = vmatpush1.msra.mxu0 0.0
    %518 = vmatprep.subr.mxu0 0.0
    %519 = vmatpush1.msra.mxu0 0.0
    %520 = vmatprep.mubr.f32.mxu0 0.0
    %521 = vmatmul.mubr.f32.gmra.mrb[0].mxu0 %v454
    %v522 = vpop.f32.mrb[0].mxu0
    %v523 = vadd.f32 0.0, %v522
    %v524 = vpop.f32.mrb[0].mxu0
    %525 = vdwg.mxu0
    %s526 = scalar_lea.vmem [#allocation7], 32
    %v527 = vld [vmem:[%s526] sm:$0xff]
    %v528 = vld [vmem:[%s526 + $0x8] sm:$0xff]
    %v529 = vld [vmem:[%s526 + $0x10] sm:$0xff]
    %v530 = vld [vmem:[%s526 + $0x18] sm:$0xff]
    %v532 = vsel %vm76, %v446, 0
    %534 = vmatprep.subr.mxu0 0.0
    %535 = vmatpush1.msra.mxu0 %v527
    %536 = vmatprep.subr.mxu0 0.0
    %537 = vmatpush1.msra.mxu0 %v528
    %538 = vmatprep.subr.mxu0 0.0
    %539 = vmatpush1.msra.mxu0 %v529
    %540 = vmatprep.subr.mxu0 0.0
    %541 = vmatpush1.msra.mxu0 %v530
    %542 = vmatprep.subr.mxu0 0.0
    %543 = vmatpush1.msra.mxu0 0.0
    %544 = vmatprep.subr.mxu0 0.0
    %545 = vmatpush1.msra.mxu0 0.0
    %546 = vmatprep.subr.mxu0 0.0
    %547 = vmatpush1.msra.mxu0 0.0
    %548 = vmatprep.subr.mxu0 0.0
    %549 = vmatpush1.msra.mxu0 0.0
    %550 = vmatprep.subr.mxu0 0.0
    %551 = vmatpush1.msra.mxu0 0.0
    %552 = vmatprep.subr.mxu0 0.0
    %553 = vmatpush1.msra.mxu0 0.0
    %554 = vmatprep.subr.mxu0 0.0
    %555 = vmatpush1.msra.mxu0 0.0
    %556 = vmatprep.subr.mxu0 0.0
    %557 = vmatpush1.msra.mxu0 0.0
    %558 = vmatprep.subr.mxu0 0.0
    %559 = vmatpush1.msra.mxu0 0.0
    %560 = vmatprep.subr.mxu0 0.0
    %561 = vmatpush1.msra.mxu0 0.0
    %562 = vmatprep.subr.mxu0 0.0
    %563 = vmatpush1.msra.mxu0 0.0
    %564 = vmatprep.subr.mxu0 0.0
    %565 = vmatpush1.msra.mxu0 0.0
    %566 = vmatprep.subr.mxu0 0.0
    %567 = vmatpush1.msra.mxu0 0.0
    %568 = vmatprep.subr.mxu0 0.0
    %569 = vmatpush1.msra.mxu0 0.0
    %570 = vmatprep.subr.mxu0 0.0
    %571 = vmatpush1.msra.mxu0 0.0
    %572 = vmatprep.subr.mxu0 0.0
    %573 = vmatpush1.msra.mxu0 0.0
    %574 = vmatprep.subr.mxu0 0.0
    %575 = vmatpush1.msra.mxu0 0.0
    %576 = vmatprep.subr.mxu0 0.0
    %577 = vmatpush1.msra.mxu0 0.0
    %578 = vmatprep.subr.mxu0 0.0
    %579 = vmatpush1.msra.mxu0 0.0
    %580 = vmatprep.subr.mxu0 0.0
    %581 = vmatpush1.msra.mxu0 0.0
    %582 = vmatprep.subr.mxu0 0.0
    %583 = vmatpush1.msra.mxu0 0.0
    %584 = vmatprep.subr.mxu0 0.0
    %585 = vmatpush1.msra.mxu0 0.0
    %586 = vmatprep.subr.mxu0 0.0
    %587 = vmatpush1.msra.mxu0 0.0
    %588 = vmatprep.subr.mxu0 0.0
    %589 = vmatpush1.msra.mxu0 0.0
    %590 = vmatprep.subr.mxu0 0.0
    %591 = vmatpush1.msra.mxu0 0.0
    %592 = vmatprep.subr.mxu0 0.0
    %593 = vmatpush1.msra.mxu0 0.0
    %594 = vmatprep.subr.mxu0 0.0
    %595 = vmatpush1.msra.mxu0 0.0
    %596 = vmatprep.subr.mxu0 0.0
    %597 = vmatpush1.msra.mxu0 0.0
    %598 = vmatprep.mubr.f32.mxu0 0.0
    %599 = vmatmul.mubr.f32.gmra.mrb[0].mxu0 %v532
    %v600 = vpop.f32.mrb[0].mxu0
    %v601 = vadd.f32 0.0, %v600
    %v602 = vpop.f32.mrb[0].mxu0
    %603 = vdwg.mxu0
    %s604 = scalar_lea.vmem [#allocation7], 64
    %v605 = vld [vmem:[%s604] sm:$0xff]
    %v606 = vld [vmem:[%s604 + $0x8] sm:$0xff]
    %v607 = vld [vmem:[%s604 + $0x10] sm:$0xff]
    %v608 = vld [vmem:[%s604 + $0x18] sm:$0xff]
    %v610 = vsel %vm76, %v447, 0
    %612 = vmatprep.subr.mxu0 0.0
    %613 = vmatpush1.msra.mxu0 %v605
    %614 = vmatprep.subr.mxu0 0.0
    %615 = vmatpush1.msra.mxu0 %v606
    %616 = vmatprep.subr.mxu0 0.0
    %617 = vmatpush1.msra.mxu0 %v607
    %618 = vmatprep.subr.mxu0 0.0
    %619 = vmatpush1.msra.mxu0 %v608
    %620 = vmatprep.subr.mxu0 0.0
    %621 = vmatpush1.msra.mxu0 0.0
    %622 = vmatprep.subr.mxu0 0.0
    %623 = vmatpush1.msra.mxu0 0.0
    %624 = vmatprep.subr.mxu0 0.0
    %625 = vmatpush1.msra.mxu0 0.0
    %626 = vmatprep.subr.mxu0 0.0
    %627 = vmatpush1.msra.mxu0 0.0
    %628 = vmatprep.subr.mxu0 0.0
    %629 = vmatpush1.msra.mxu0 0.0
    %630 = vmatprep.subr.mxu0 0.0
    %631 = vmatpush1.msra.mxu0 0.0
    %632 = vmatprep.subr.mxu0 0.0
    %633 = vmatpush1.msra.mxu0 0.0
    %634 = vmatprep.subr.mxu0 0.0
    %635 = vmatpush1.msra.mxu0 0.0
    %636 = vmatprep.subr.mxu0 0.0
    %637 = vmatpush1.msra.mxu0 0.0
    %638 = vmatprep.subr.mxu0 0.0
    %639 = vmatpush1.msra.mxu0 0.0
    %640 = vmatprep.subr.mxu0 0.0
    %641 = vmatpush1.msra.mxu0 0.0
    %642 = vmatprep.subr.mxu0 0.0
    %643 = vmatpush1.msra.mxu0 0.0
    %644 = vmatprep.subr.mxu0 0.0
    %645 = vmatpush1.msra.mxu0 0.0
    %646 = vmatprep.subr.mxu0 0.0
    %647 = vmatpush1.msra.mxu0 0.0
    %648 = vmatprep.subr.mxu0 0.0
    %649 = vmatpush1.msra.mxu0 0.0
    %650 = vmatprep.subr.mxu0 0.0
    %651 = vmatpush1.msra.mxu0 0.0
    %652 = vmatprep.subr.mxu0 0.0
    %653 = vmatpush1.msra.mxu0 0.0
    %654 = vmatprep.subr.mxu0 0.0
    %655 = vmatpush1.msra.mxu0 0.0
    %656 = vmatprep.subr.mxu0 0.0
    %657 = vmatpush1.msra.mxu0 0.0
    %658 = vmatprep.subr.mxu0 0.0
    %659 = vmatpush1.msra.mxu0 0.0
    %660 = vmatprep.subr.mxu0 0.0
    %661 = vmatpush1.msra.mxu0 0.0
    %662 = vmatprep.subr.mxu0 0.0
    %663 = vmatpush1.msra.mxu0 0.0
    %664 = vmatprep.subr.mxu0 0.0
    %665 = vmatpush1.msra.mxu0 0.0
    %666 = vmatprep.subr.mxu0 0.0
    %667 = vmatpush1.msra.mxu0 0.0
    %668 = vmatprep.subr.mxu0 0.0
    %669 = vmatpush1.msra.mxu0 0.0
    %670 = vmatprep.subr.mxu0 0.0
    %671 = vmatpush1.msra.mxu0 0.0
    %672 = vmatprep.subr.mxu0 0.0
    %673 = vmatpush1.msra.mxu0 0.0
    %674 = vmatprep.subr.mxu0 0.0
    %675 = vmatpush1.msra.mxu0 0.0
    %676 = vmatprep.mubr.f32.mxu0 0.0
    %677 = vmatmul.mubr.f32.gmra.mrb[0].mxu0 %v610
    %v678 = vpop.f32.mrb[0].mxu0
    %v679 = vadd.f32 0.0, %v678
    %v680 = vpop.f32.mrb[0].mxu0
    %681 = vdwg.mxu0
    %s682 = scalar_lea.vmem [#allocation7], 96
    %v683 = vld [vmem:[%s682] sm:$0xff]
    %v684 = vld [vmem:[%s682 + $0x8] sm:$0xff]
    %v685 = vld [vmem:[%s682 + $0x10] sm:$0xff]
    %v686 = vld [vmem:[%s682 + $0x18] sm:$0xff]
    %v688 = vsel %vm76, %v448, 0
    %690 = vmatprep.subr.mxu0 0.0
    %691 = vmatpush1.msra.mxu0 %v683
    %692 = vmatprep.subr.mxu0 0.0
    %693 = vmatpush1.msra.mxu0 %v684
    %694 = vmatprep.subr.mxu0 0.0
    %695 = vmatpush1.msra.mxu0 %v685
    %696 = vmatprep.subr.mxu0 0.0
    %697 = vmatpush1.msra.mxu0 %v686
    %698 = vmatprep.subr.mxu0 0.0
    %699 = vmatpush1.msra.mxu0 0.0
    %700 = vmatprep.subr.mxu0 0.0
    %701 = vmatpush1.msra.mxu0 0.0
    %702 = vmatprep.subr.mxu0 0.0
    %703 = vmatpush1.msra.mxu0 0.0
    %704 = vmatprep.subr.mxu0 0.0
    %705 = vmatpush1.msra.mxu0 0.0
    %706 = vmatprep.subr.mxu0 0.0
    %707 = vmatpush1.msra.mxu0 0.0
    %708 = vmatprep.subr.mxu0 0.0
    %709 = vmatpush1.msra.mxu0 0.0
    %710 = vmatprep.subr.mxu0 0.0
    %711 = vmatpush1.msra.mxu0 0.0
    %712 = vmatprep.subr.mxu0 0.0
    %713 = vmatpush1.msra.mxu0 0.0
    %714 = vmatprep.subr.mxu0 0.0
    %715 = vmatpush1.msra.mxu0 0.0
    %716 = vmatprep.subr.mxu0 0.0
    %717 = vmatpush1.msra.mxu0 0.0
    %718 = vmatprep.subr.mxu0 0.0
    %719 = vmatpush1.msra.mxu0 0.0
    %720 = vmatprep.subr.mxu0 0.0
    %721 = vmatpush1.msra.mxu0 0.0
    %722 = vmatprep.subr.mxu0 0.0
    %723 = vmatpush1.msra.mxu0 0.0
    %724 = vmatprep.subr.mxu0 0.0
    %725 = vmatpush1.msra.mxu0 0.0
    %726 = vmatprep.subr.mxu0 0.0
    %727 = vmatpush1.msra.mxu0 0.0
    %728 = vmatprep.subr.mxu0 0.0
    %729 = vmatpush1.msra.mxu0 0.0
    %730 = vmatprep.subr.mxu0 0.0
    %731 = vmatpush1.msra.mxu0 0.0
    %732 = vmatprep.subr.mxu0 0.0
    %733 = vmatpush1.msra.mxu0 0.0
    %734 = vmatprep.subr.mxu0 0.0
    %735 = vmatpush1.msra.mxu0 0.0
    %736 = vmatprep.subr.mxu0 0.0
    %737 = vmatpush1.msra.mxu0 0.0
    %738 = vmatprep.subr.mxu0 0.0
    %739 = vmatpush1.msra.mxu0 0.0
    %740 = vmatprep.subr.mxu0 0.0
    %741 = vmatpush1.msra.mxu0 0.0
    %742 = vmatprep.subr.mxu0 0.0
    %743 = vmatpush1.msra.mxu0 0.0
    %744 = vmatprep.subr.mxu0 0.0
    %745 = vmatpush1.msra.mxu0 0.0
    %746 = vmatprep.subr.mxu0 0.0
    %747 = vmatpush1.msra.mxu0 0.0
    %748 = vmatprep.subr.mxu0 0.0
    %749 = vmatpush1.msra.mxu0 0.0
    %750 = vmatprep.subr.mxu0 0.0
    %751 = vmatpush1.msra.mxu0 0.0
    %752 = vmatprep.subr.mxu0 0.0
    %753 = vmatpush1.msra.mxu0 0.0
    %754 = vmatprep.mubr.f32.mxu0 0.0
    %755 = vmatmul.mubr.f32.gmra.mrb[0].mxu0 %v688
    %v756 = vpop.f32.mrb[0].mxu0
    %v757 = vadd.f32 0.0, %v756
    %v758 = vpop.f32.mrb[0].mxu0
    %759 = vdwg.mxu0
    %v760 = vsel %vm76, %v523, 0.0
    %v761 = vsel %vm76, %v601, 0.0
    %v762 = vadd.f32 %v760, %v761
    %v763 = vsel %vm76, %v679, 0.0
    %v764 = vadd.f32 %v762, %v763
    %v765 = vsel %vm76, %v757, 0.0
    %v766 = vadd.f32 %v764, %v765
    %v767 = vrot.slane %v766, 4
    %v768 = vadd.f32 %v766, %v767
    %v769 = vrot.slane %v768, 2
    %v770 = vadd.f32 %v768, %v769
    %v771 = vrot.slane %v770, 1
    %v772 = vadd.f32 %v770, %v771
    %v773 = vmul.f32 %v772, 0.03125
    %v774 = vmul.f32 %v523, %v523
    %v775 = vmul.f32 %v601, %v601
    %v776 = vmul.f32 %v679, %v679
    %v777 = vmul.f32 %v757, %v757
    %v778 = vsel %vm76, %v774, 0.0
    %v779 = vsel %vm76, %v775, 0.0
    %v780 = vadd.f32 %v778, %v779
    %v781 = vsel %vm76, %v776, 0.0
    %v782 = vadd.f32 %v780, %v781
    %v783 = vsel %vm76, %v777, 0.0
    %v784 = vadd.f32 %v782, %v783
    %v785 = vrot.slane %v784, 4
    %v786 = vadd.f32 %v784, %v785
    %v787 = vrot.slane %v786, 2
    %v788 = vadd.f32 %v786, %v787
    %v789 = vrot.slane %v788, 1
    %v790 = vadd.f32 %v788, %v789
    %v791 = vmul.f32 %v790, 0.03125
    %v792 = vld [vmem:[%s5] sm:$0x1]
    %v793 = vmul.f32 %v773, %v773
    %v794 = vsub.f32 %v791, %v793
    %v795 = vadd.f32 %v794, 1e-05
    %v796 = vrsqrt.pop %v795
    %v797 = vmul.f32 %v792, %v796
    %v798 = vld [vmem:[%s6] sm:$0x1]
    %v799 = vmul.f32 %v773, %v797
    %v800 = vsub.f32 %v798, %v799
    %v802 = vlaneseq
    %v803 = vshrl.u32 %v802, 7
    %v804 = vsub.s32 0, %v803
    %v805 = vrot.slane %v797, %v804
    %v807 = vmul.f32 %v523, %v805
    %v808 = vmul.f32 %v601, %v805
    %v809 = vmul.f32 %v679, %v805
    %v810 = vmul.f32 %v757, %v805
    %v812 = vlaneseq
    %v813 = vshrl.u32 %v812, 7
    %v814 = vsub.s32 0, %v813
    %v815 = vrot.slane %v800, %v814
    %v817 = vadd.f32 %v807, %v815
    %v818 = vadd.f32 %v808, %v815
    %v819 = vadd.f32 %v809, %v815
    %v820 = vadd.f32 %v810, %v815
    %v821 = vadd.f32 %v817, %v68
    %v822 = vadd.f32 %v818, %v69
    %v823 = vadd.f32 %v819, %v70
    %v824 = vadd.f32 %v820, %v71
    %v825 = vmax.f32 %v821, 0.0
    %v826 = vmax.f32 %v822, 0.0
    %v827 = vmax.f32 %v823, 0.0
    %v828 = vmax.f32 %v824, 0.0
    %829 = vst.msk [vmem:[#allocation8] sm:$0xff] %vm76, %v825
    %830 = vst.msk [vmem:[#allocation8 + $0x8] sm:$0xff] %vm76, %v826
    %831 = vst.msk [vmem:[#allocation8 + $0x10] sm:$0xff] %vm76, %v827
    %832 = vst.msk [vmem:[#allocation8 + $0x18] sm:$0xff] %vm76, %v828
    // Predicated region
    $region42: #{residual_block_pallas.1} parent=1 // pred_check
      _
    $region43: #{residual_block_pallas.1} parent=1 // pred_check_branch
      %834 = sbr.rel (0) target = $region45
    $region44: #{residual_block_pallas.1} parent=1 // pred_region
      %s836 = ssub.s32 512, 512
      %837 = vsyncadd [#allocation4], %s836
      %s838 = sshll.u32 [#allocation8], 4
      %s839 = int_to_ptr.vmem [resolvable:$true] %s838
      %844 = dma.vmem_to_hbm [thread:$0]  %s839, 512, %s7, [#allocation4], 128, 128, 8
    $region45: #{residual_block_pallas.1} parent=1 // pred_fallthru
      _
    // Predicated region
    $region46: #{residual_block_pallas.1} parent=1 // pred_check
      _
    $region47: #{residual_block_pallas.1} parent=1 // pred_check_branch
      %846 = sbr.rel (0) target = $region49
    $region48: #{residual_block_pallas.1} parent=1 // pred_region
      %847 = dma.done [#allocation4], 512
    $region49: #{residual_block_pallas.1} parent=1 // pred_fallthru
      _
    %848 = vsyncpa [#allocation3], 1
    %849 = vsyncpa [#allocation6], 1
    %850 = vsyncpa [#allocation4], 1

</llo_original>
